<compile_context>
chip_gen: v5e
topology: v5e:2x2
jax: 0.10.0
libtpu: 0.0.40
codegen_flags: <defaults>
</compile_context>

<pallas_src>
import functools

import jax
import jax.numpy as jnp
from jax import lax
from jax.experimental import pallas as pl
from jax.experimental.pallas import tpu as pltpu

LN_EPS = 1e-5

# Scoped VMEM request: above the per-generation defaults (16 MiB v5e / 32 MiB
# v6e, v7x), below v7x's 64 MiB physical capacity.
_VMEM_LIMIT_BYTES = 48 << 20
# Tile-sizing budget (leaves headroom inside the scoped limit above for the
# double-buffered DMA buffers + f32 working set).
_TILE_BUDGET_BYTES = 28 << 20
_MAX_TILE_ROWS = 1024
_MIN_TILE_ROWS = 32     # multiple of the sublane pack for f32 / bf16 / int8


def _ln_rows(x_ref, gamma_ref, beta_ref, *, apply_affine):
    """LayerNorm of a (tile_rows, D) tile; one-pass sum / sum-of-squares stats."""
    x = x_ref[...].astype(jnp.float32)
    inv_d = jnp.float32(1.0 / x.shape[-1])
    s = jnp.sum(x, axis=-1, keepdims=True)
    ss = jnp.sum(x * x, axis=-1, keepdims=True)
    mean = s * inv_d
    var = jnp.maximum(ss * inv_d - mean * mean, 0.0)   # clamp cancellation
    y = (x - mean) * lax.rsqrt(var + LN_EPS)
    if apply_affine:
        y = y * gamma_ref[...] + beta_ref[...]
    return y


def _ln_kernel(x_ref, gamma_ref, beta_ref, o_ref, *, apply_affine):
    y = _ln_rows(x_ref, gamma_ref, beta_ref, apply_affine=apply_affine)
    o_ref[...] = y.astype(o_ref.dtype)


def _ln_add_kernel(x_ref, gamma_ref, beta_ref, x2_ref, o_ref, *, apply_affine):
    y = _ln_rows(x_ref, gamma_ref, beta_ref, apply_affine=apply_affine)
    o_ref[...] = (y + x2_ref[...].astype(jnp.float32)).astype(o_ref.dtype)


def _pick_tile_rows(rows, d, itemsize, n_row_inputs):
    """Row-tile size: as large as the VMEM budget allows, but keep >= 2 grid
    steps when possible so both v7x TensorCores get work (no-op on v5e/v6e)."""
    # double-buffered row-tiled inputs + double-buffered output + f32 working set
    per_row = 2 * n_row_inputs * d * itemsize + 2 * d * itemsize + 2 * d * 4
    t = _TILE_BUDGET_BYTES // max(per_row, 1)
    t = min(t, _MAX_TILE_ROWS)
    if rows > 2 * _MIN_TILE_ROWS:
        t = min(t, pl.cdiv(rows, 2))
    t = max(_MIN_TILE_ROWS, (t // _MIN_TILE_ROWS) * _MIN_TILE_ROWS)
    return int(t)


def layernorm_pallas(x, gamma, beta, residual=None, *, apply_affine=True,
                     tile_rows=None):
    """LayerNorm over the last dim of x (any leading shape), optionally fused
    with an elementwise residual add (`residual` must match x's shape)."""
    orig_shape = x.shape
    d = orig_shape[-1]
    x2d = x.reshape(-1, d)
    rows = x2d.shape[0]

    fuse_add = residual is not None
    if fuse_add:
        assert residual.shape == orig_shape, "fused residual must match x's shape"
        r2d = residual.reshape(-1, d)

    if tile_rows is None:
        tile_rows = _pick_tile_rows(rows, d, x2d.dtype.itemsize,
                                    2 if fuse_add else 1)
    if tile_rows >= rows:
        # Tiny inputs: a single full-extent block is always a legal block shape.
        tile_rows = rows
    # No explicit padding / slicing copies: ragged last block handled by Pallas.
    grid = (pl.cdiv(rows, tile_rows),)

    gamma2d = gamma.reshape(1, d).astype(jnp.float32)
    beta2d = beta.reshape(1, d).astype(jnp.float32)

    # NOTE: for best store bandwidth D should be a multiple of 128 (lane-dense);
    # small D (e.g. the demo's 32) still works but under-uses lanes.
    row_spec = pl.BlockSpec((tile_rows, d), lambda i: (i, 0))
    vec_spec = pl.BlockSpec((1, d), lambda i: (0, 0))   # resident across the grid

    if fuse_add:
        kernel = functools.partial(_ln_add_kernel, apply_affine=apply_affine)
        in_specs = [row_spec, vec_spec, vec_spec, row_spec]
        args = (x2d, gamma2d, beta2d, r2d)
    else:
        kernel = functools.partial(_ln_kernel, apply_affine=apply_affine)
        in_specs = [row_spec, vec_spec, vec_spec]
        args = (x2d, gamma2d, beta2d)

    out = pl.pallas_call(
        kernel,
        out_shape=jax.ShapeDtypeStruct((rows, d), x.dtype),
        grid_spec=pltpu.PrefetchScalarGridSpec(
            num_scalar_prefetch=0,
            grid=grid,
            in_specs=in_specs,
            out_specs=row_spec,
        ),
        compiler_params=pltpu.CompilerParams(
            dimension_semantics=("parallel",),
            vmem_limit_bytes=_VMEM_LIMIT_BYTES,
        ),
    )(*args)

    return out.reshape(orig_shape)


class PreNorm2:
    """JAX/Pallas port of PreNorm2: fn(LayerNorm(x), x2, **kwargs)."""

    def __init__(self, dim, fn, fusion_factor=1, fn_is_elementwise_add=False):
        d = dim * fusion_factor
        # Deterministic init matching nn.LayerNorm defaults (gamma=1, beta=0).
        self.gamma = jnp.ones((d,), jnp.float32)
        self.beta = jnp.zeros((d,), jnp.float32)
        self._identity_affine = True   # default init -> skip the affine VPU ops
        self.fn = fn
        # Opt-in: caller asserts fn(y, x2) == y + x2 so it can be fused in-kernel.
        self.fn_is_elementwise_add = fn_is_elementwise_add

    def __call__(self, x, x2=None, **kwargs):
        apply_affine = not self._identity_affine
        if (self.fn_is_elementwise_add and x2 is not None
                and x2.shape == x.shape and not kwargs):
            return layernorm_pallas(x, self.gamma, self.beta, residual=x2,
                                    apply_affine=apply_affine)
        # TODO(synk): generic `fn` (e.g. attention) is an arbitrary injected
        # sub-module; only the LayerNorm (+ optional elementwise add) is in Pallas.
        y = layernorm_pallas(x, self.gamma, self.beta, apply_affine=apply_affine)
        return self.fn(y, x2, **kwargs)


def _layernorm_ref(x, gamma, beta):
    mean = jnp.mean(x, axis=-1, keepdims=True)
    var = jnp.mean((x - mean) ** 2, axis=-1, keepdims=True)
    return (x - mean) / jnp.sqrt(var + LN_EPS) * gamma + beta


if __name__ == "__main__":
    key = jax.random.PRNGKey(0)
    B, N, dim, fusion_factor = 2, 8, 32, 1
    D = dim * fusion_factor

    k1, k2, k3, k4, k5 = jax.random.split(key, 5)
    x = jax.random.normal(k1, (B, N, D), dtype=jnp.float32)
    x2 = jax.random.normal(k2, (B, N, D), dtype=jnp.float32)

    # Demo fn: simple elementwise fusion of the normalized stream with x2.
    def demo_fn(y, x2, **kwargs):
        return y + x2

    # 1) Fused path: LayerNorm + elementwise fn in a single kernel pass.
    module = PreNorm2(dim, demo_fn, fusion_factor=fusion_factor,
                      fn_is_elementwise_add=True)
    out_fused = jax.block_until_ready(module(x, x2))

    # 2) Generic path: LayerNorm kernel, fn applied outside.
    module_generic = PreNorm2(dim, demo_fn, fusion_factor=fusion_factor)
    out_generic = jax.block_until_ready(module_generic(x, x2))

    ref = demo_fn(_layernorm_ref(x, module.gamma, module.beta), x2)
    assert out_fused.shape == (B, N, D)
    assert jnp.max(jnp.abs(out_fused - ref)) < 1e-4
    assert jnp.max(jnp.abs(out_generic - ref)) < 1e-4

    # 3) Affine + ragged-grid check: rows not a multiple of the tile, lane-dense
    #    D=128, non-trivial gamma/beta, multi-step parallel grid.
    rows, D2 = 111, 128
    xg = jax.random.normal(k3, (rows, D2), dtype=jnp.float32)
    gamma = jax.random.normal(k4, (D2,), dtype=jnp.float32)
    beta = jax.random.normal(k5, (D2,), dtype=jnp.float32)
    out_ln = jax.block_until_ready(
        layernorm_pallas(xg, gamma, beta, apply_affine=True, tile_rows=32))
    ref_ln = _layernorm_ref(xg, gamma, beta)
    assert jnp.max(jnp.abs(out_ln - ref_ln)) < 1e-4

    print("KERNEL_OK")
</pallas_src>

<mosaic_0001>
module attributes {stable_mosaic.version = 11 : i64} {
  func.func @_ln_add_kernel(%arg0: i32, %arg1: memref<16x32xf32, #tpu.memory_space<vmem>>, %arg2: memref<1x32xf32, #tpu.memory_space<vmem>>, %arg3: memref<1x32xf32, #tpu.memory_space<vmem>>, %arg4: memref<16x32xf32, #tpu.memory_space<vmem>>, %arg5: memref<16x32xf32, #tpu.memory_space<vmem>>) attributes {dimension_semantics = [#tpu.dimension_semantics<parallel>], iteration_bounds = array<i64: 1>, scalar_prefetch = 0 : i64, scratch_operands = 0 : i64, tpu.core_type = #tpu.core_type<tc>, window_params = [{transform_indices = @transform_0, window_bounds = array<i64: 16, 32>}, {pipeline_mode = #tpu.pipeline_mode<synchronous>, transform_indices = @transform_1, window_bounds = array<i64: 1, 32>}, {pipeline_mode = #tpu.pipeline_mode<synchronous>, transform_indices = @transform_2, window_bounds = array<i64: 1, 32>}, {transform_indices = @transform_3, window_bounds = array<i64: 16, 32>}, {transform_indices = @transform_4, window_bounds = array<i64: 16, 32>}]} {
    %c0 = arith.constant 0 : index
    %c0_0 = arith.constant 0 : index
    %0 = vector.load %arg1[%c0, %c0_0] : memref<16x32xf32, #tpu.memory_space<vmem>>, vector<16x32xf32>
    %cst = arith.constant dense<0.000000e+00> : vector<16xf32>
    %1 = vector.multi_reduction <add>, %0, %cst [1] : vector<16x32xf32> to vector<16xf32>
    %2 = vector.shape_cast %1 : vector<16xf32> to vector<16x1xf32>
    %3 = arith.mulf %0, %0 : vector<16x32xf32>
    %cst_1 = arith.constant dense<0.000000e+00> : vector<16xf32>
    %4 = vector.multi_reduction <add>, %3, %cst_1 [1] : vector<16x32xf32> to vector<16xf32>
    %5 = vector.shape_cast %4 : vector<16xf32> to vector<16x1xf32>
    %cst_2 = arith.constant 3.125000e-02 : f32
    %6 = vector.broadcast %cst_2 : f32 to vector<16x1xf32>
    %7 = arith.mulf %2, %6 : vector<16x1xf32>
    %cst_3 = arith.constant 3.125000e-02 : f32
    %8 = vector.broadcast %cst_3 : f32 to vector<16x1xf32>
    %9 = arith.mulf %5, %8 : vector<16x1xf32>
    %10 = arith.mulf %7, %7 : vector<16x1xf32>
    %11 = arith.subf %9, %10 : vector<16x1xf32>
    %cst_4 = arith.constant 0.000000e+00 : f32
    %12 = vector.broadcast %cst_4 : f32 to vector<16x1xf32>
    %13 = arith.maximumf %11, %12 : vector<16x1xf32>
    %14 = vector.broadcast %7 : vector<16x1xf32> to vector<16x32xf32>
    %15 = arith.subf %0, %14 : vector<16x32xf32>
    %cst_5 = arith.constant 9.99999974E-6 : f32
    %16 = vector.broadcast %cst_5 : f32 to vector<16x1xf32>
    %17 = arith.addf %13, %16 : vector<16x1xf32>
    %18 = math.rsqrt %17 : vector<16x1xf32>
    %19 = vector.broadcast %18 : vector<16x1xf32> to vector<16x32xf32>
    %20 = arith.mulf %15, %19 : vector<16x32xf32>
    %c0_6 = arith.constant 0 : index
    %c0_7 = arith.constant 0 : index
    %21 = vector.load %arg4[%c0_6, %c0_7] : memref<16x32xf32, #tpu.memory_space<vmem>>, vector<16x32xf32>
    %22 = arith.addf %20, %21 : vector<16x32xf32>
    %c0_8 = arith.constant 0 : index
    %c0_9 = arith.constant 0 : index
    %23 = vector.load %arg5[%c0_8, %c0_9] : memref<16x32xf32, #tpu.memory_space<vmem>>, vector<16x32xf32>
    tpu.vector_store %arg5[%c0_8, %c0_9], %22 {strides = array<i32>} : memref<16x32xf32, #tpu.memory_space<vmem>>, vector<16x32xf32>,
    return
  }
  func.func @transform_0(%arg0: i32) -> (i32, i32) {
    %c0_i32 = arith.constant 0 : i32
    %c0_i32_0 = arith.constant 0 : i32
    return %arg0, %c0_i32 : i32, i32
  }
  func.func @transform_1(%arg0: i32) -> (i32, i32) {
    %c0_i32 = arith.constant 0 : i32
    %c0_i32_0 = arith.constant 0 : i32
    %c0_i32_1 = arith.constant 0 : i32
    return %c0_i32, %c0_i32_0 : i32, i32
  }
  func.func @transform_2(%arg0: i32) -> (i32, i32) {
    %c0_i32 = arith.constant 0 : i32
    %c0_i32_0 = arith.constant 0 : i32
    %c0_i32_1 = arith.constant 0 : i32
    return %c0_i32, %c0_i32_0 : i32, i32
  }
  func.func @transform_3(%arg0: i32) -> (i32, i32) {
    %c0_i32 = arith.constant 0 : i32
    %c0_i32_0 = arith.constant 0 : i32
    return %arg0, %c0_i32 : i32, i32
  }
  func.func @transform_4(%arg0: i32) -> (i32, i32) {
    %c0_i32 = arith.constant 0 : i32
    %c0_i32_0 = arith.constant 0 : i32
    return %arg0, %c0_i32 : i32, i32
  }
}

</mosaic_0001>

<llo_original>
// kernel: tpu_custom_call.1
$region0: #{tpu_custom_call.1}
  #allocation0 [shape = 'u32[]', space=smem, size = 0x4, offset = 0x4, fixed_abs, tag = 'smem constant byte address 0x4 - core index']
  #allocation1 [shape = 'u32[72,128]{1,0:T(1,128)}', space=vmem, size = 0x9000, scoped, tag = 'internal scratch']
  %s0 = inlined_call_operand.hbm [shape: f32[16,32], index: 0, kind: input, shape index: {}]
  %s1 = inlined_call_operand.hbm [shape: f32[1,32], index: 1, kind: input, shape index: {}]
  %s2 = inlined_call_operand.vmem [shape: f32[1,32], index: 2, kind: input, shape index: {}]
  %s3 = inlined_call_operand.hbm [shape: f32[16,32], index: 3, kind: input, shape index: {}]
  %s4 = inlined_call_operand.hbm [shape: f32[16,32], index: 4, kind: output, shape index: {}]
  %s5 = sld [smem:[#allocation0]]
  $region38: #{tpu_custom_call.1} parent=0
    _
  %s7 = ssub.s32 1, %s5
  %s8 = scalar_select 0, %s7, %s5
  $region1: #{tpu_custom_call.1} parent=0
    #allocation2 [shape = 'u8[8192]{0}', space=vmem, size = 0x2000, scoped, tag = 'input window, operand 0, single buffered']
    #allocation3 [shape = 's32[1]{0}', space=sflag, size = 0x4, scoped, tag = 'scoped memory for tpu_custom_call.1']
    #allocation4 [shape = 's32[1]{0}', space=sflag, size = 0x4, scoped, tag = 'scoped memory for tpu_custom_call.1']
    #allocation5 [shape = 'u8[512]{0}', space=vmem, size = 0x400, scoped, tag = 'input window, operand 1, single buffered']
    #allocation6 [shape = 's32[1]{0}', space=sflag, size = 0x4, scoped, tag = 'scoped memory for tpu_custom_call.1']
    #allocation7 [shape = 'u8[8192]{0}', space=vmem, size = 0x2000, scoped, tag = 'input window, operand 3, single buffered']
    #allocation8 [shape = 'u8[8192]{0}', space=vmem, size = 0x2000, scoped, tag = 'output window, operand 0, single buffered']
    %9 = vsyncpa [#allocation3], 0
    %10 = vsyncpa [#allocation6], 0
    %11 = vsyncpa [#allocation4], 0
    // Predicated region
    $region2: #{tpu_custom_call.1} parent=1 // pred_check
      _
    $region3: #{tpu_custom_call.1} parent=1 // pred_check_branch
      %13 = sbr.rel (0) target = $region5
    $region4: #{tpu_custom_call.1} parent=1 // pred_region
      %15 = vsyncadd [#allocation3], 0
      %s16 = sshll.u32 %s0, 4
      %s17 = int_to_ptr.hbm [resolvable:$true] %s16
      %s18 = sshll.u32 [#allocation2], 4
      %s19 = int_to_ptr.vmem [resolvable:$true] %s18
      %24 = dma.hbm_to_vmem [thread:$0]  %s17, 256, %s19, [#allocation3], 128, 128, 8
    $region5: #{tpu_custom_call.1} parent=1 // pred_fallthru
      _
    // Predicated region
    $region6: #{tpu_custom_call.1} parent=1 // pred_check
      _
    $region7: #{tpu_custom_call.1} parent=1 // pred_check_branch
      %26 = sbr.rel (0) target = $region9
    $region8: #{tpu_custom_call.1} parent=1 // pred_region
      %28 = vsyncadd [#allocation6], 0
      %s30 = sshll.u32 %s1, 4
      %s31 = int_to_ptr.hbm [resolvable:$true] %s30
      %s32 = sshll.u32 [#allocation5], 4
      %s33 = int_to_ptr.vmem [resolvable:$true] %s32
      %35 = dma.hbm_to_vmem [thread:$0]  %s31, 16, %s33, [#allocation6]
    $region9: #{tpu_custom_call.1} parent=1 // pred_fallthru
      _
    // Predicated region
    $region10: #{tpu_custom_call.1} parent=1 // pred_check
      _
    $region11: #{tpu_custom_call.1} parent=1 // pred_check_branch
      %37 = sbr.rel (0) target = $region13
    $region12: #{tpu_custom_call.1} parent=1 // pred_region
      _
    $region13: #{tpu_custom_call.1} parent=1 // pred_fallthru
      _
    // Predicated region
    $region14: #{tpu_custom_call.1} parent=1 // pred_check
      _
    $region15: #{tpu_custom_call.1} parent=1 // pred_check_branch
      %39 = sbr.rel (0) target = $region17
    $region16: #{tpu_custom_call.1} parent=1 // pred_region
      %41 = vsyncadd [#allocation6], 0
      %s42 = sshll.u32 %s3, 4
      %s43 = int_to_ptr.hbm [resolvable:$true] %s42
      %s44 = sshll.u32 [#allocation7], 4
      %s45 = int_to_ptr.vmem [resolvable:$true] %s44
      %50 = dma.hbm_to_vmem [thread:$0]  %s43, 256, %s45, [#allocation6], 128, 128, 8
    $region17: #{tpu_custom_call.1} parent=1 // pred_fallthru
      _
    // Predicated region
    $region18: #{tpu_custom_call.1} parent=1 // pred_check
      _
    $region19: #{tpu_custom_call.1} parent=1 // pred_check_branch
      %52 = sbr.rel (0) target = $region21
    $region20: #{tpu_custom_call.1} parent=1 // pred_region
      %54 = dma.done [#allocation3], 256
    $region21: #{tpu_custom_call.1} parent=1 // pred_fallthru
      _
    // Predicated region
    $region22: #{tpu_custom_call.1} parent=1 // pred_check
      _
    $region23: #{tpu_custom_call.1} parent=1 // pred_check_branch
      %56 = sbr.rel (0) target = $region25
    $region24: #{tpu_custom_call.1} parent=1 // pred_region
      %58 = dma.done [#allocation6], 16
    $region25: #{tpu_custom_call.1} parent=1 // pred_fallthru
      _
    // Predicated region
    $region26: #{tpu_custom_call.1} parent=1 // pred_check
      _
    $region27: #{tpu_custom_call.1} parent=1 // pred_check_branch
      %60 = sbr.rel (0) target = $region29
    $region28: #{tpu_custom_call.1} parent=1 // pred_region
      %62 = dma.done [#allocation6], 256
    $region29: #{tpu_custom_call.1} parent=1 // pred_fallthru
      _
    %v63 = vld [vmem:[#allocation2] sm:$0xff]
    %v64 = vld [vmem:[#allocation2 + $0x8] sm:$0xff]
    %vm65 = vcmask 261120
    %v66 = vsel %vm65, %v63, 0.0
    %67 = vadd.xlane.f32.xlu0 %v66
    %v68 = vpop.xlane.xlu0 %67
    %v69 = vsel %vm65, %v64, 0.0
    %70 = vadd.xlane.f32.xlu0 %v69
    %v71 = vpop.xlane.xlu0 %70
    %v72 = vmul.f32 %v63, %v63
    %v73 = vmul.f32 %v64, %v64
    %v74 = vsel %vm65, %v72, 0.0
    %75 = vadd.xlane.f32.xlu0 %v74
    %v76 = vpop.xlane.xlu0 %75
    %v77 = vsel %vm65, %v73, 0.0
    %78 = vadd.xlane.f32.xlu0 %v77
    %v79 = vpop.xlane.xlu0 %78
    %v80 = vmul.f32 %v68, 0.03125
    %v81 = vmul.f32 %v71, 0.03125
    %v82 = vmul.f32 %v76, 0.03125
    %v83 = vmul.f32 %v79, 0.03125
    %v84 = vmul.f32 %v80, %v80
    %v85 = vmul.f32 %v81, %v81
    %v86 = vsub.f32 %v82, %v84
    %v87 = vsub.f32 %v83, %v85
    %v88 = vmax.f32 %v86, 0.0
    %v89 = vmax.f32 %v87, 0.0
    %v90 = vsub.f32 %v63, %v80
    %v91 = vsub.f32 %v64, %v81
    %v92 = vadd.f32 %v88, 1e-05
    %v93 = vadd.f32 %v89, 1e-05
    %v94 = vrsqrt.pop %v92
    %v95 = vmul.f32 %v94, %v92
    %v96 = vmul.f32 %v95, %v94
    %v97 = vmul.f32 0.5, %v96
    %v98 = vsub.f32 1.5, %v97
    %v99 = vmul.f32 %v94, %v98
    %vm100 = vweird.f32 %v92
    %vm101 = vweird.f32 %v94
    %vm102 = vmor %vm100, %vm101
    %v103 = vsel %vm102, %v94, %v99
    %v104 = vrsqrt.pop %v93
    %v105 = vmul.f32 %v104, %v93
    %v106 = vmul.f32 %v105, %v104
    %v107 = vmul.f32 0.5, %v106
    %v108 = vsub.f32 1.5, %v107
    %v109 = vmul.f32 %v104, %v108
    %vm110 = vweird.f32 %v93
    %vm111 = vweird.f32 %v104
    %vm112 = vmor %vm110, %vm111
    %v113 = vsel %vm112, %v104, %v109
    %v114 = vmul.f32 %v90, %v103
    %v115 = vmul.f32 %v91, %v113
    %v116 = vld [vmem:[#allocation7] sm:$0xff]
    %v117 = vld [vmem:[#allocation7 + $0x8] sm:$0xff]
    %v118 = vadd.f32 %v114, %v116
    %v119 = vadd.f32 %v115, %v117
    %120 = vst.msk [vmem:[#allocation8] sm:$0xff] %vm65, %v118
    %121 = vst.msk [vmem:[#allocation8 + $0x8] sm:$0xff] %vm65, %v119
    // Predicated region
    $region30: #{tpu_custom_call.1} parent=1 // pred_check
      _
    $region31: #{tpu_custom_call.1} parent=1 // pred_check_branch
      %123 = sbr.rel (0) target = $region33
    $region32: #{tpu_custom_call.1} parent=1 // pred_region
      %125 = vsyncadd [#allocation4], 0
      %s126 = sshll.u32 [#allocation8], 4
      %s127 = int_to_ptr.vmem [resolvable:$true] %s126
      %s128 = sshll.u32 %s4, 4
      %s129 = int_to_ptr.hbm [resolvable:$true] %s128
      %134 = dma.vmem_to_hbm [thread:$0]  %s127, 256, %s129, [#allocation4], 128, 128, 8
    $region33: #{tpu_custom_call.1} parent=1 // pred_fallthru
      _
    // Predicated region
    $region34: #{tpu_custom_call.1} parent=1 // pred_check
      _
    $region35: #{tpu_custom_call.1} parent=1 // pred_check_branch
      %136 = sbr.rel (0) target = $region37
    $region36: #{tpu_custom_call.1} parent=1 // pred_region
      %138 = dma.done [#allocation4], 256
    $region37: #{tpu_custom_call.1} parent=1 // pred_fallthru
      _
    %139 = vsyncpa [#allocation3], 1
    %140 = vsyncpa [#allocation6], 1
    %141 = vsyncpa [#allocation4], 1

</llo_original>
